<compile_context>
chip_gen: v7x
topology: tpu7x:2x2x1
jax: 0.10.0
libtpu: 0.0.40
codegen_flags: <defaults>
</compile_context>

<pallas_src>
import jax
import jax.numpy as jnp
from jax.experimental import pallas as pl
from jax.experimental.pallas import tpu as pltpu

# ----- static config -----
K = 3              # depthwise kernel size
STRIDE = 1         # stride (residual branch active)
PAD = K // 2
C_IN = 8
C_EXP = 24
C_OUT = 16
H = 16
W = 16
HW = H * W         # 256 per-image spatial (128-aligned)
N = 2
NHW = N * HW       # 512 lanes processed per kernel invocation
BN_EPS = 1e-5

# ----- packed parameter slab layout (single f32 operand, lane width = C_EXP) -----
NPW = C_EXP + C_OUT            # 40 rows: fused expand + shortcut 1x1 weights
WCAT_R0 = 0                    # (40, C_IN)   expand/shortcut 1x1 weights (BN-scaled)
W3_R0 = WCAT_R0 + NPW          # (16, C_EXP)  pointwise conv3 weights (BN-scaled)
DW_R0 = W3_R0 + C_OUT          # (24, K*K)    depthwise weights, tap-major on lanes
B1_R0 = DW_R0 + C_EXP          # (24, 1)      bn1 bias
BSC_R0 = B1_R0 + C_EXP         # (16, 1)      shortcut bn bias
B2_R0 = BSC_R0 + C_OUT         # (24, 1)      bn2 bias
B3_R0 = B2_R0 + C_EXP          # (16, 1)      bn3 bias
P_ROWS = B3_R0 + C_OUT         # 160 (all block offsets are multiples of 8)
P_COLS = C_EXP                 # 24


def block_kernel(x_ref, p_ref, o_ref):
    # x_ref: (N, C_IN, HW). Lane-concat the N images at a 128-aligned seam -> (C_IN, 512).
    x2d = jnp.concatenate([x_ref[n] for n in range(N)], axis=1)          # (8, 512) f32
    xb = x2d.astype(jnp.bfloat16)

    # ---- fused expand (conv1*bn1_scale) + shortcut (conv_sc*bnsc_scale) 1x1 convs ----
    wcat = p_ref[WCAT_R0:WCAT_R0 + NPW, 0:C_IN].astype(jnp.bfloat16)     # (40, 8)
    hcat = jnp.dot(wcat, xb, preferred_element_type=jnp.float32)         # (40, 512) f32
    b1 = p_ref[B1_R0:B1_R0 + C_EXP, 0:1]                                 # (24, 1)
    bsc = p_ref[BSC_R0:BSC_R0 + C_OUT, 0:1]                              # (16, 1)
    h = jnp.maximum(hcat[0:C_EXP, :] + b1, 0.0)                          # expand, ReLU
    sc = hcat[C_EXP:NPW, :] + bsc                                        # shortcut (no act)

    # ---- depthwise 3x3 (stride 1, pad 1), separable roll structure ----
    # Row shifts (+/-W lanes) done once; per-column partials reduced over ki; then
    # column shifts (+/-1 lane). Masks (from iota) kill rows/columns that fall outside
    # the image, including lanes that wrap across the image seam / array boundary.
    lane = jax.lax.broadcasted_iota(jnp.int32, (1, NHW), 1)
    q = lane % HW                              # per-image flattened spatial index
    col = lane % W                             # spatial column index

    up = jnp.where(q >= W, pltpu.roll(h, W, axis=1), 0.0)                # h[p - W]
    dn = jnp.where(q < HW - W, pltpu.roll(h, NHW - W, axis=1), 0.0)      # h[p + W]

    dw = p_ref[DW_R0:DW_R0 + C_EXP, 0:K * K]                             # (24, 9) f32

    def wtap(ki, kj):
        t = ki * K + kj
        return dw[:, t:t + 1]                                            # (24, 1)

    # per-kj partials (kj=0,1,2 <-> dj=-1,0,+1), reduced over ki
    s = [wtap(0, kj) * up + wtap(1, kj) * h + wtap(2, kj) * dn for kj in range(K)]

    acc = s[1]                                                           # dj = 0
    acc = acc + jnp.where(col >= 1, pltpu.roll(s[0], 1, axis=1), 0.0)        # dj = -1
    acc = acc + jnp.where(col < W - 1, pltpu.roll(s[2], NHW - 1, axis=1), 0.0)  # dj = +1

    b2 = p_ref[B2_R0:B2_R0 + C_EXP, 0:1]                                 # (24, 1)
    h2 = jnp.maximum(acc + b2, 0.0)

    # ---- pointwise conv3 (* bn3_scale folded) ----
    w3 = p_ref[W3_R0:W3_R0 + C_OUT, 0:C_EXP].astype(jnp.bfloat16)        # (16, 24)
    out = jnp.dot(w3, h2.astype(jnp.bfloat16), preferred_element_type=jnp.float32)
    b3 = p_ref[B3_R0:B3_R0 + C_OUT, 0:1]                                 # (16, 1)

    # ---- residual add (stride == 1) and lane-dense split store (128-aligned slices) ----
    out = out + b3 + sc                                                  # (16, 512)
    o_ref[0] = out[:, 0:HW]
    o_ref[1] = out[:, HW:NHW]

    # TODO(synk): semodule (SE block) is None in this configuration; not implemented here.


@jax.jit
def mbv3_block(x_nchw, params):
    x = x_nchw.reshape(N, C_IN, HW).astype(jnp.float32)   # free reshape, stays NCHW-order

    out = pl.pallas_call(
        block_kernel,
        out_shape=jax.ShapeDtypeStruct((N, C_OUT, HW), jnp.float32),
        grid=(1,),
        in_specs=[
            pl.BlockSpec((N, C_IN, HW), lambda i: (0, 0, 0)),
            pl.BlockSpec((P_ROWS, P_COLS), lambda i: (0, 0)),
        ],
        out_specs=pl.BlockSpec((N, C_OUT, HW), lambda i: (0, 0, 0)),
    )(x, params)

    return out.reshape(N, C_OUT, H, W)                    # back to NCHW (free reshape)


# ----- deterministic parameter construction (synthetic; no checkpoint) -----
def fold_bn(gamma, beta, mean, var, eps=BN_EPS):
    scale = gamma / jnp.sqrt(var + eps)
    bias = beta - mean * scale
    return scale, bias


def make_raw_params(key):
    ks = jax.random.split(key, 8)

    def bn_raw(k, c):
        k1, k2, k3, k4 = jax.random.split(k, 4)
        gamma = 1.0 + 0.1 * jax.random.normal(k1, (c,), jnp.float32)
        beta = 0.1 * jax.random.normal(k2, (c,), jnp.float32)
        mean = 0.1 * jax.random.normal(k3, (c,), jnp.float32)
        var = 0.5 + 0.1 * jnp.abs(jax.random.normal(k4, (c,), jnp.float32))
        return (gamma, beta, mean, var)

    w1 = 0.1 * jax.random.normal(ks[0], (C_EXP, C_IN), jnp.float32)    # conv1 (1x1)
    bn1 = bn_raw(ks[1], C_EXP)
    wdw = 0.1 * jax.random.normal(ks[2], (C_EXP, K, K), jnp.float32)   # depthwise KxK
    bn2 = bn_raw(ks[3], C_EXP)
    w3 = 0.1 * jax.random.normal(ks[4], (C_OUT, C_EXP), jnp.float32)   # conv3 (1x1)
    bn3 = bn_raw(ks[5], C_OUT)
    wsc = 0.1 * jax.random.normal(ks[6], (C_OUT, C_IN), jnp.float32)   # shortcut 1x1
    bnsc = bn_raw(ks[7], C_OUT)
    return (w1, bn1, wdw, bn2, w3, bn3, wsc, bnsc)


def pack_params(raw):
    """Fold BN scales into conv weights and pack everything into one f32 slab."""
    (w1, bn1, wdw, bn2, w3, bn3, wsc, bnsc) = raw
    s1, b1 = fold_bn(*bn1)
    s2, b2 = fold_bn(*bn2)
    s3, b3 = fold_bn(*bn3)
    ssc, bsc = fold_bn(*bnsc)

    w1f = w1 * s1[:, None]            # (C_EXP, C_IN)
    wscf = wsc * ssc[:, None]         # (C_OUT, C_IN)
    w3f = w3 * s3[:, None]            # (C_OUT, C_EXP)
    wdwf = wdw * s2[:, None, None]    # (C_EXP, K, K)

    p = jnp.zeros((P_ROWS, P_COLS), jnp.float32)
    p = p.at[WCAT_R0:WCAT_R0 + C_EXP, 0:C_IN].set(w1f)
    p = p.at[WCAT_R0 + C_EXP:WCAT_R0 + NPW, 0:C_IN].set(wscf)
    p = p.at[W3_R0:W3_R0 + C_OUT, 0:C_EXP].set(w3f)
    p = p.at[DW_R0:DW_R0 + C_EXP, 0:K * K].set(wdwf.reshape(C_EXP, K * K))
    p = p.at[B1_R0:B1_R0 + C_EXP, 0].set(b1)
    p = p.at[BSC_R0:BSC_R0 + C_OUT, 0].set(bsc)
    p = p.at[B2_R0:B2_R0 + C_EXP, 0].set(b2)
    p = p.at[B3_R0:B3_R0 + C_OUT, 0].set(b3)
    return p


# ----- pure-JAX reference (un-folded BN math, NCHW) for the correctness check -----
def reference(x, raw):
    (w1, bn1, wdw, bn2, w3, bn3, wsc, bnsc) = raw

    def bn(y, p):
        gamma, beta, mean, var = p
        s = gamma / jnp.sqrt(var + BN_EPS)
        b = beta - mean * s
        return y * s.reshape(1, -1, 1, 1) + b.reshape(1, -1, 1, 1)

    h = jax.nn.relu(bn(jnp.einsum('oc,nchw->nohw', w1, x), bn1))
    hp = jnp.pad(h, ((0, 0), (0, 0), (PAD, PAD), (PAD, PAD)))
    acc = jnp.zeros_like(h)
    for ki in range(K):
        for kj in range(K):
            acc = acc + hp[:, :, ki:ki + H, kj:kj + W] * wdw[:, ki, kj].reshape(1, -1, 1, 1)
    h2 = jax.nn.relu(bn(acc, bn2))
    out = bn(jnp.einsum('oc,nchw->nohw', w3, h2), bn3)
    scv = bn(jnp.einsum('oc,nchw->nohw', wsc, x), bnsc)
    return out + scv


if __name__ == "__main__":
    key = jax.random.PRNGKey(0)
    kx, kp = jax.random.split(key)
    x = jax.random.normal(kx, (N, C_IN, H, W), jnp.float32)   # NCHW input, like PyTorch
    raw = make_raw_params(kp)
    params = pack_params(raw)

    y = mbv3_block(x, params)
    y = jax.block_until_ready(y)

    y_ref = reference(x, raw)
    assert y.shape == (N, C_OUT, H, W)
    # Tolerance relaxed vs. a pure-f32 comparison because MXU inputs are bf16
    # (f32 accumulation); observed error is ~1e-3, bound set with ~10x margin.
    if not bool(jnp.allclose(y, y_ref, atol=2e-2, rtol=2e-2)):
        raise AssertionError("Pallas kernel does not match reference")
    print("KERNEL_OK")
</pallas_src>

<mosaic_0001>
module attributes {stable_mosaic.version = 11 : i64} {
  func.func @block_kernel(%arg0: i32, %arg1: memref<2x8x256xf32, #tpu.memory_space<vmem>>, %arg2: memref<160x24xf32, #tpu.memory_space<vmem>>, %arg3: memref<2x16x256xf32, #tpu.memory_space<vmem>>) attributes {dimension_semantics = [#tpu.dimension_semantics<arbitrary>], iteration_bounds = array<i64: 1>, scalar_prefetch = 0 : i64, scratch_operands = 0 : i64, tpu.core_type = #tpu.core_type<tc>, window_params = [{pipeline_mode = #tpu.pipeline_mode<synchronous>, transform_indices = @transform_0, window_bounds = array<i64: 2, 8, 256>}, {pipeline_mode = #tpu.pipeline_mode<synchronous>, transform_indices = @transform_1, window_bounds = array<i64: 160, 24>}, {pipeline_mode = #tpu.pipeline_mode<synchronous>, transform_indices = @transform_2, window_bounds = array<i64: 2, 16, 256>}]} {
    %c0 = arith.constant 0 : index
    %c0_0 = arith.constant 0 : index
    %c0_1 = arith.constant 0 : index
    %0 = vector.load %arg1[%c0, %c0_0, %c0_1] : memref<2x8x256xf32, #tpu.memory_space<vmem>>, vector<1x8x256xf32>
    %1 = vector.shape_cast %0 : vector<1x8x256xf32> to vector<8x256xf32>
    %c1 = arith.constant 1 : index
    %c0_2 = arith.constant 0 : index
    %c0_3 = arith.constant 0 : index
    %2 = vector.load %arg1[%c1, %c0_2, %c0_3] : memref<2x8x256xf32, #tpu.memory_space<vmem>>, vector<1x8x256xf32>
    %3 = vector.shape_cast %2 : vector<1x8x256xf32> to vector<8x256xf32>
    %4 = tpu.concatenate %1, %3 in 1 : vector<8x256xf32>, vector<8x256xf32> -> vector<8x512xf32>
    %5 = arith.truncf %4 : vector<8x512xf32> to vector<8x512xbf16>
    %c0_4 = arith.constant 0 : index
    %c0_5 = arith.constant 0 : index
    %6 = vector.load %arg2[%c0_4, %c0_5] : memref<160x24xf32, #tpu.memory_space<vmem>>, vector<40x8xf32>
    %7 = arith.truncf %6 : vector<40x8xf32> to vector<40x8xbf16>
    %cst = arith.constant dense<0.000000e+00> : vector<40x512xf32>
    %8 = tpu.matmul %7, %5, %cst {dimension_numbers = #tpu.dot_dimension_numbers<[1], [0], [0], [1], [0, 0, 1, 1], [], []>} : vector<40x8xbf16>, vector<8x512xbf16>, vector<40x512xf32> -> vector<40x512xf32>
    %c80 = arith.constant 80 : index
    %c0_6 = arith.constant 0 : index
    %9 = vector.load %arg2[%c80, %c0_6] : memref<160x24xf32, #tpu.memory_space<vmem>>, vector<24x1xf32>
    %c104 = arith.constant 104 : index
    %c0_7 = arith.constant 0 : index
    %10 = vector.load %arg2[%c104, %c0_7] : memref<160x24xf32, #tpu.memory_space<vmem>>, vector<16x1xf32>
    %11 = vector.extract_strided_slice %8 {offsets = [0, 0], sizes = [24, 512], strides = [1, 1]} : vector<40x512xf32> to vector<24x512xf32>
    %12 = vector.broadcast %9 : vector<24x1xf32> to vector<24x512xf32>
    %13 = arith.addf %11, %12 : vector<24x512xf32>
    %cst_8 = arith.constant 0.000000e+00 : f32
    %14 = vector.broadcast %cst_8 : f32 to vector<24x512xf32>
    %15 = arith.maximumf %13, %14 : vector<24x512xf32>
    %16 = vector.extract_strided_slice %8 {offsets = [24, 0], sizes = [16, 512], strides = [1, 1]} : vector<40x512xf32> to vector<16x512xf32>
    %17 = vector.broadcast %10 : vector<16x1xf32> to vector<16x512xf32>
    %18 = arith.addf %16, %17 : vector<16x512xf32>
    %19 = tpu.iota {dimensions = array<i32: 1>} : vector<1x512xi32>
    %c256_i32 = arith.constant 256 : i32
    %c0_i32 = arith.constant 0 : i32
    %20 = arith.cmpi eq, %c256_i32, %c0_i32 : i32
    %c1_i32 = arith.constant 1 : i32
    %21 = arith.select %20, %c1_i32, %c256_i32 : i32
    %22 = vector.broadcast %21 : i32 to vector<1x512xi32>
    %23 = arith.remsi %19, %22 : vector<1x512xi32>
    %c0_i32_9 = arith.constant 0 : i32
    %24 = vector.broadcast %c0_i32_9 : i32 to vector<1x512xi32>
    %25 = arith.cmpi ne, %23, %24 : vector<1x512xi32>
    %c0_i32_10 = arith.constant 0 : i32
    %26 = vector.broadcast %c0_i32_10 : i32 to vector<1x512xi32>
    %27 = arith.cmpi slt, %23, %26 : vector<1x512xi32>
    %c0_i32_11 = arith.constant 0 : i32
    %28 = arith.cmpi slt, %21, %c0_i32_11 : i32
    %29 = vector.broadcast %28 : i1 to vector<1x512xi1>
    %30 = vector.broadcast %29 : vector<1x512xi1> to vector<1x512xi1>
    %31 = arith.xori %27, %30 : vector<1x512xi1>
    %32 = arith.andi %31, %25 : vector<1x512xi1>
    %33 = vector.broadcast %21 : i32 to vector<1x512xi32>
    %34 = arith.addi %23, %33 : vector<1x512xi32>
    %35 = arith.select %32, %34, %23 : vector<1x512xi1>, vector<1x512xi32>
    %c16_i32 = arith.constant 16 : i32
    %c0_i32_12 = arith.constant 0 : i32
    %36 = arith.cmpi eq, %c16_i32, %c0_i32_12 : i32
    %c1_i32_13 = arith.constant 1 : i32
    %37 = arith.select %36, %c1_i32_13, %c16_i32 : i32
    %38 = vector.broadcast %37 : i32 to vector<1x512xi32>
    %39 = arith.remsi %19, %38 : vector<1x512xi32>
    %c0_i32_14 = arith.constant 0 : i32
    %40 = vector.broadcast %c0_i32_14 : i32 to vector<1x512xi32>
    %41 = arith.cmpi ne, %39, %40 : vector<1x512xi32>
    %c0_i32_15 = arith.constant 0 : i32
    %42 = vector.broadcast %c0_i32_15 : i32 to vector<1x512xi32>
    %43 = arith.cmpi slt, %39, %42 : vector<1x512xi32>
    %c0_i32_16 = arith.constant 0 : i32
    %44 = arith.cmpi slt, %37, %c0_i32_16 : i32
    %45 = vector.broadcast %44 : i1 to vector<1x512xi1>
    %46 = vector.broadcast %45 : vector<1x512xi1> to vector<1x512xi1>
    %47 = arith.xori %43, %46 : vector<1x512xi1>
    %48 = arith.andi %47, %41 : vector<1x512xi1>
    %49 = vector.broadcast %37 : i32 to vector<1x512xi32>
    %50 = arith.addi %39, %49 : vector<1x512xi32>
    %51 = arith.select %48, %50, %39 : vector<1x512xi1>, vector<1x512xi32>
    %c16_i32_17 = arith.constant 16 : i32
    %52 = vector.broadcast %c16_i32_17 : i32 to vector<1x512xi32>
    %53 = arith.cmpi sge, %35, %52 : vector<1x512xi32>
    %c16_i32_18 = arith.constant 16 : i32
    %54 = tpu.dynamic_rotate %15 by %c16_i32_18 dim 1 : vector<24x512xf32>, i32 -> vector<24x512xf32>
    %cst_19 = arith.constant 0.000000e+00 : f32
    %55 = vector.shape_cast %53 : vector<1x512xi1> to vector<1x512xi1>
    %56 = vector.broadcast %55 : vector<1x512xi1> to vector<24x512xi1>
    %57 = vector.broadcast %cst_19 : f32 to vector<24x512xf32>
    %58 = arith.select %56, %54, %57 : vector<24x512xi1>, vector<24x512xf32>
    %c240_i32 = arith.constant 240 : i32
    %59 = vector.broadcast %c240_i32 : i32 to vector<1x512xi32>
    %60 = arith.cmpi slt, %35, %59 : vector<1x512xi32>
    %c496_i32 = arith.constant 496 : i32
    %61 = tpu.dynamic_rotate %15 by %c496_i32 dim 1 : vector<24x512xf32>, i32 -> vector<24x512xf32>
    %cst_20 = arith.constant 0.000000e+00 : f32
    %62 = vector.shape_cast %60 : vector<1x512xi1> to vector<1x512xi1>
    %63 = vector.broadcast %62 : vector<1x512xi1> to vector<24x512xi1>
    %64 = vector.broadcast %cst_20 : f32 to vector<24x512xf32>
    %65 = arith.select %63, %61, %64 : vector<24x512xi1>, vector<24x512xf32>
    %c56 = arith.constant 56 : index
    %c0_21 = arith.constant 0 : index
    %66 = vector.load %arg2[%c56, %c0_21] : memref<160x24xf32, #tpu.memory_space<vmem>>, vector<24x9xf32>
    %67 = vector.extract_strided_slice %66 {offsets = [0, 0], sizes = [24, 1], strides = [1, 1]} : vector<24x9xf32> to vector<24x1xf32>
    %68 = vector.broadcast %67 : vector<24x1xf32> to vector<24x512xf32>
    %69 = arith.mulf %68, %58 : vector<24x512xf32>
    %70 = vector.extract_strided_slice %66 {offsets = [0, 3], sizes = [24, 1], strides = [1, 1]} : vector<24x9xf32> to vector<24x1xf32>
    %71 = vector.broadcast %70 : vector<24x1xf32> to vector<24x512xf32>
    %72 = arith.mulf %71, %15 : vector<24x512xf32>
    %73 = arith.addf %69, %72 : vector<24x512xf32>
    %74 = vector.extract_strided_slice %66 {offsets = [0, 6], sizes = [24, 1], strides = [1, 1]} : vector<24x9xf32> to vector<24x1xf32>
    %75 = vector.broadcast %74 : vector<24x1xf32> to vector<24x512xf32>
    %76 = arith.mulf %75, %65 : vector<24x512xf32>
    %77 = arith.addf %73, %76 : vector<24x512xf32>
    %78 = vector.extract_strided_slice %66 {offsets = [0, 1], sizes = [24, 1], strides = [1, 1]} : vector<24x9xf32> to vector<24x1xf32>
    %79 = vector.broadcast %78 : vector<24x1xf32> to vector<24x512xf32>
    %80 = arith.mulf %79, %58 : vector<24x512xf32>
    %81 = vector.extract_strided_slice %66 {offsets = [0, 4], sizes = [24, 1], strides = [1, 1]} : vector<24x9xf32> to vector<24x1xf32>
    %82 = vector.broadcast %81 : vector<24x1xf32> to vector<24x512xf32>
    %83 = arith.mulf %82, %15 : vector<24x512xf32>
    %84 = arith.addf %80, %83 : vector<24x512xf32>
    %85 = vector.extract_strided_slice %66 {offsets = [0, 7], sizes = [24, 1], strides = [1, 1]} : vector<24x9xf32> to vector<24x1xf32>
    %86 = vector.broadcast %85 : vector<24x1xf32> to vector<24x512xf32>
    %87 = arith.mulf %86, %65 : vector<24x512xf32>
    %88 = arith.addf %84, %87 : vector<24x512xf32>
    %89 = vector.extract_strided_slice %66 {offsets = [0, 2], sizes = [24, 1], strides = [1, 1]} : vector<24x9xf32> to vector<24x1xf32>
    %90 = vector.broadcast %89 : vector<24x1xf32> to vector<24x512xf32>
    %91 = arith.mulf %90, %58 : vector<24x512xf32>
    %92 = vector.extract_strided_slice %66 {offsets = [0, 5], sizes = [24, 1], strides = [1, 1]} : vector<24x9xf32> to vector<24x1xf32>
    %93 = vector.broadcast %92 : vector<24x1xf32> to vector<24x512xf32>
    %94 = arith.mulf %93, %15 : vector<24x512xf32>
    %95 = arith.addf %91, %94 : vector<24x512xf32>
    %96 = vector.extract_strided_slice %66 {offsets = [0, 8], sizes = [24, 1], strides = [1, 1]} : vector<24x9xf32> to vector<24x1xf32>
    %97 = vector.broadcast %96 : vector<24x1xf32> to vector<24x512xf32>
    %98 = arith.mulf %97, %65 : vector<24x512xf32>
    %99 = arith.addf %95, %98 : vector<24x512xf32>
    %c1_i32_22 = arith.constant 1 : i32
    %100 = vector.broadcast %c1_i32_22 : i32 to vector<1x512xi32>
    %101 = arith.cmpi sge, %51, %100 : vector<1x512xi32>
    %c1_i32_23 = arith.constant 1 : i32
    %102 = tpu.dynamic_rotate %77 by %c1_i32_23 dim 1 : vector<24x512xf32>, i32 -> vector<24x512xf32>
    %cst_24 = arith.constant 0.000000e+00 : f32
    %103 = vector.shape_cast %101 : vector<1x512xi1> to vector<1x512xi1>
    %104 = vector.broadcast %103 : vector<1x512xi1> to vector<24x512xi1>
    %105 = vector.broadcast %cst_24 : f32 to vector<24x512xf32>
    %106 = arith.select %104, %102, %105 : vector<24x512xi1>, vector<24x512xf32>
    %107 = arith.addf %88, %106 : vector<24x512xf32>
    %c15_i32 = arith.constant 15 : i32
    %108 = vector.broadcast %c15_i32 : i32 to vector<1x512xi32>
    %109 = arith.cmpi slt, %51, %108 : vector<1x512xi32>
    %c511_i32 = arith.constant 511 : i32
    %110 = tpu.dynamic_rotate %99 by %c511_i32 dim 1 : vector<24x512xf32>, i32 -> vector<24x512xf32>
    %cst_25 = arith.constant 0.000000e+00 : f32
    %111 = vector.shape_cast %109 : vector<1x512xi1> to vector<1x512xi1>
    %112 = vector.broadcast %111 : vector<1x512xi1> to vector<24x512xi1>
    %113 = vector.broadcast %cst_25 : f32 to vector<24x512xf32>
    %114 = arith.select %112, %110, %113 : vector<24x512xi1>, vector<24x512xf32>
    %115 = arith.addf %107, %114 : vector<24x512xf32>
    %c120 = arith.constant 120 : index
    %c0_26 = arith.constant 0 : index
    %116 = vector.load %arg2[%c120, %c0_26] : memref<160x24xf32, #tpu.memory_space<vmem>>, vector<24x1xf32>
    %117 = vector.broadcast %116 : vector<24x1xf32> to vector<24x512xf32>
    %118 = arith.addf %115, %117 : vector<24x512xf32>
    %cst_27 = arith.constant 0.000000e+00 : f32
    %119 = vector.broadcast %cst_27 : f32 to vector<24x512xf32>
    %120 = arith.maximumf %118, %119 : vector<24x512xf32>
    %c40 = arith.constant 40 : index
    %c0_28 = arith.constant 0 : index
    %121 = vector.load %arg2[%c40, %c0_28] : memref<160x24xf32, #tpu.memory_space<vmem>>, vector<16x24xf32>
    %122 = arith.truncf %121 : vector<16x24xf32> to vector<16x24xbf16>
    %123 = arith.truncf %120 : vector<24x512xf32> to vector<24x512xbf16>
    %cst_29 = arith.constant dense<0.000000e+00> : vector<16x512xf32>
    %124 = tpu.matmul %122, %123, %cst_29 {dimension_numbers = #tpu.dot_dimension_numbers<[1], [0], [0], [1], [0, 0, 1, 1], [], []>} : vector<16x24xbf16>, vector<24x512xbf16>, vector<16x512xf32> -> vector<16x512xf32>
    %c144 = arith.constant 144 : index
    %c0_30 = arith.constant 0 : index
    %125 = vector.load %arg2[%c144, %c0_30] : memref<160x24xf32, #tpu.memory_space<vmem>>, vector<16x1xf32>
    %126 = vector.broadcast %125 : vector<16x1xf32> to vector<16x512xf32>
    %127 = arith.addf %124, %126 : vector<16x512xf32>
    %128 = arith.addf %127, %18 : vector<16x512xf32>
    %129 = vector.extract_strided_slice %128 {offsets = [0, 0], sizes = [16, 256], strides = [1, 1]} : vector<16x512xf32> to vector<16x256xf32>
    %c0_31 = arith.constant 0 : index
    %c0_32 = arith.constant 0 : index
    %c0_33 = arith.constant 0 : index
    %130 = vector.load %arg3[%c0_31, %c0_32, %c0_33] : memref<2x16x256xf32, #tpu.memory_space<vmem>>, vector<1x16x256xf32>
    %131 = vector.shape_cast %130 : vector<1x16x256xf32> to vector<16x256xf32>
    %132 = vector.shape_cast %129 : vector<16x256xf32> to vector<1x16x256xf32>
    tpu.vector_store %arg3[%c0_31, %c0_32, %c0_33], %132 {strides = array<i32>} : memref<2x16x256xf32, #tpu.memory_space<vmem>>, vector<1x16x256xf32>,
    %133 = vector.extract_strided_slice %128 {offsets = [0, 256], sizes = [16, 256], strides = [1, 1]} : vector<16x512xf32> to vector<16x256xf32>
    %c1_34 = arith.constant 1 : index
    %c0_35 = arith.constant 0 : index
    %c0_36 = arith.constant 0 : index
    %134 = vector.load %arg3[%c1_34, %c0_35, %c0_36] : memref<2x16x256xf32, #tpu.memory_space<vmem>>, vector<1x16x256xf32>
    %135 = vector.shape_cast %134 : vector<1x16x256xf32> to vector<16x256xf32>
    %136 = vector.shape_cast %133 : vector<16x256xf32> to vector<1x16x256xf32>
    tpu.vector_store %arg3[%c1_34, %c0_35, %c0_36], %136 {strides = array<i32>} : memref<2x16x256xf32, #tpu.memory_space<vmem>>, vector<1x16x256xf32>,
    return
  }
  func.func @transform_0(%arg0: i32) -> (i32, i32, i32) {
    %c0_i32 = arith.constant 0 : i32
    %c0_i32_0 = arith.constant 0 : i32
    %c0_i32_1 = arith.constant 0 : i32
    %c0_i32_2 = arith.constant 0 : i32
    return %c0_i32, %c0_i32_0, %c0_i32_1 : i32, i32, i32
  }
  func.func @transform_1(%arg0: i32) -> (i32, i32) {
    %c0_i32 = arith.constant 0 : i32
    %c0_i32_0 = arith.constant 0 : i32
    %c0_i32_1 = arith.constant 0 : i32
    return %c0_i32, %c0_i32_0 : i32, i32
  }
  func.func @transform_2(%arg0: i32) -> (i32, i32, i32) {
    %c0_i32 = arith.constant 0 : i32
    %c0_i32_0 = arith.constant 0 : i32
    %c0_i32_1 = arith.constant 0 : i32
    %c0_i32_2 = arith.constant 0 : i32
    return %c0_i32, %c0_i32_0, %c0_i32_1 : i32, i32, i32
  }
}

</mosaic_0001>

<llo_original>
// kernel: mbv3_block.1
$region0: #{mbv3_block.1}
  #allocation0 [shape = 'u32[]', space=smem, size = 0x4, offset = 0x4, fixed_abs, tag = 'smem constant byte address 0x4 - core index']
  #allocation1 [shape = 'u32[144,128]{1,0:T(1,128)}', space=vmem, size = 0x12000, scoped, tag = 'internal scratch']
  %s0 = inlined_call_operand.vmem [shape: f32[2,8,256], index: 0, kind: input, shape index: {}]
  %s1 = inlined_call_operand.vmem [shape: f32[160,24], index: 1, kind: input, shape index: {}]
  %s2 = inlined_call_operand.vmem [shape: f32[2,16,256], index: 2, kind: output, shape index: {}]
  %s3 = sld [smem:[#allocation0]]
  $region18: #{mbv3_block.1} parent=0
    _
  %s5 = ssub.s32 1, %s3
  %s6 = scalar_select 0, %s5, %s3
  // Predicated region
  $region2: #{mbv3_block.1} parent=0 // pred_check
    _
  $region3: #{mbv3_block.1} parent=0 // pred_check_branch
    %8 = sbr.rel (0) target = $region5
  $region4: #{mbv3_block.1} parent=0 // pred_region
    _
  $region5: #{mbv3_block.1} parent=0 // pred_fallthru
    _
  // Predicated region
  $region6: #{mbv3_block.1} parent=0 // pred_check
    _
  $region7: #{mbv3_block.1} parent=0 // pred_check_branch
    %10 = sbr.rel (0) target = $region9
  $region8: #{mbv3_block.1} parent=0 // pred_region
    _
  $region9: #{mbv3_block.1} parent=0 // pred_fallthru
    _
  %v12 = vld [vmem:[%s0] sm:$0xff]
  %v13 = vld [vmem:[%s0 + $0x8] sm:$0xff]
  %s14 = scalar_lea.vmem %s0, 16
  %v15 = vld [vmem:[%s14] sm:$0xff]
  %v16 = vld [vmem:[%s14 + $0x8] sm:$0xff]
  %v17 = vpack.c.bf16 %v12, %v12
  %v18 = vpack.c.bf16 %v13, %v13
  %v19 = vpack.c.bf16 %v15, %v15
  %v20 = vpack.c.bf16 %v16, %v16
  %v21 = vld [vmem:[%s1] sm:$0xff]
  %v22 = vld [vmem:[%s1 + $0x8] sm:$0xff]
  %v23 = vld [vmem:[%s1 + $0x10] sm:$0xff]
  %v24 = vld [vmem:[%s1 + $0x18] sm:$0xff]
  %v25 = vld [vmem:[%s1 + $0x20] sm:$0xff]
  %v26 = vpack.c.bf16 %v22, %v21
  %v27 = vpack.c.bf16 %v24, %v23
  %v28 = vpack.c.bf16 %v25, %v25
  %vm29 = vcmask 64512
  %v31 = vsel %vm29, %v26, 0
  %v34 = vsel %vm29, %v27, 0
  %v37 = vsel %vm29, %v28, 0
  %vm39 = vcmask 1043456
  %v41 = vsel %vm39, %v17, 0
  %v44 = vsel %vm39, %v18, 0
  %v47 = vsel %vm39, %v19, 0
  %v50 = vsel %vm39, %v20, 0
  %52 = vmatprep.subr.bf16.mxu0 %v44
  %53 = vmatpush1.bf16.msra.mxu0 %v41
  %54 = vmatprep.subr.bf16.mxu0 0
  %55 = vmatpush1.bf16.msra.mxu0 0
  %56 = vmatprep.subr.bf16.mxu0 0
  %57 = vmatpush1.bf16.msra.mxu0 0
  %58 = vmatprep.subr.bf16.mxu0 0
  %59 = vmatpush1.bf16.msra.mxu0 0
  %60 = vmatprep.subr.bf16.mxu0 0
  %61 = vmatpush1.bf16.msra.mxu0 0
  %62 = vmatprep.subr.bf16.mxu0 0
  %63 = vmatpush1.bf16.msra.mxu0 0
  %64 = vmatprep.subr.bf16.mxu0 0
  %65 = vmatpush1.bf16.msra.mxu0 0
  %66 = vmatprep.subr.bf16.mxu0 0
  %67 = vmatpush1.bf16.msra.mxu0 0
  %68 = vmatprep.subr.bf16.mxu0 0
  %69 = vmatpush1.bf16.msra.mxu0 0
  %70 = vmatprep.subr.bf16.mxu0 0
  %71 = vmatpush1.bf16.msra.mxu0 0
  %72 = vmatprep.subr.bf16.mxu0 0
  %73 = vmatpush1.bf16.msra.mxu0 0
  %74 = vmatprep.subr.bf16.mxu0 0
  %75 = vmatpush1.bf16.msra.mxu0 0
  %76 = vmatprep.subr.bf16.mxu0 0
  %77 = vmatpush1.bf16.msra.mxu0 0
  %78 = vmatprep.subr.bf16.mxu0 0
  %79 = vmatpush1.bf16.msra.mxu0 0
  %80 = vmatprep.subr.bf16.mxu0 0
  %81 = vmatpush1.bf16.msra.mxu0 0
  %82 = vmatprep.subr.bf16.mxu0 0
  %83 = vmatpush1.bf16.msra.mxu0 0
  %84 = vmatprep.mubr.bf16.mxu0 0
  %85 = vmatmul.mubr.bf16.gmra.mrb[0].mxu0 %v31
  %v86 = vpop.f32.mrb[0].mxu0
  %v87 = vadd.f32 0.0, %v86
  %v88 = vpop.f32.mrb[0].mxu0
  %v89 = vadd.f32 0.0, %v88
  %v90 = vpop.f32.mrb[0].mxu0
  %v91 = vadd.f32 0.0, %v90
  %v92 = vpop.f32.mrb[0].mxu0
  %v93 = vadd.f32 0.0, %v92
  %94 = vmatprep.mubr.bf16.mxu0 0
  %95 = vmatmul.mubr.bf16.gmra.mrb[0].mxu0 %v34
  %v96 = vpop.f32.mrb[0].mxu0
  %v97 = vadd.f32 0.0, %v96
  %v98 = vpop.f32.mrb[0].mxu0
  %v99 = vadd.f32 0.0, %v98
  %v100 = vpop.f32.mrb[0].mxu0
  %v101 = vadd.f32 0.0, %v100
  %v102 = vpop.f32.mrb[0].mxu0
  %v103 = vadd.f32 0.0, %v102
  %104 = vmatprep.mubr.bf16.mxu0 0
  %105 = vmatmul.mubr.bf16.gmra.mrb[0].mxu0 %v37
  %v106 = vpop.f32.mrb[0].mxu0
  %v107 = vadd.f32 0.0, %v106
  %v108 = vpop.f32.mrb[0].mxu0
  %v109 = vadd.f32 0.0, %v108
  %v110 = vpop.f32.mrb[0].mxu0
  %v111 = vpop.f32.mrb[0].mxu0
  %112 = vdwg.mxu0
  %113 = vmatprep.subr.bf16.mxu0 %v50
  %114 = vmatpush1.bf16.msra.mxu0 %v47
  %115 = vmatprep.subr.bf16.mxu0 0
  %116 = vmatpush1.bf16.msra.mxu0 0
  %117 = vmatprep.subr.bf16.mxu0 0
  %118 = vmatpush1.bf16.msra.mxu0 0
  %119 = vmatprep.subr.bf16.mxu0 0
  %120 = vmatpush1.bf16.msra.mxu0 0
  %121 = vmatprep.subr.bf16.mxu0 0
  %122 = vmatpush1.bf16.msra.mxu0 0
  %123 = vmatprep.subr.bf16.mxu0 0
  %124 = vmatpush1.bf16.msra.mxu0 0
  %125 = vmatprep.subr.bf16.mxu0 0
  %126 = vmatpush1.bf16.msra.mxu0 0
  %127 = vmatprep.subr.bf16.mxu0 0
  %128 = vmatpush1.bf16.msra.mxu0 0
  %129 = vmatprep.subr.bf16.mxu0 0
  %130 = vmatpush1.bf16.msra.mxu0 0
  %131 = vmatprep.subr.bf16.mxu0 0
  %132 = vmatpush1.bf16.msra.mxu0 0
  %133 = vmatprep.subr.bf16.mxu0 0
  %134 = vmatpush1.bf16.msra.mxu0 0
  %135 = vmatprep.subr.bf16.mxu0 0
  %136 = vmatpush1.bf16.msra.mxu0 0
  %137 = vmatprep.subr.bf16.mxu0 0
  %138 = vmatpush1.bf16.msra.mxu0 0
  %139 = vmatprep.subr.bf16.mxu0 0
  %140 = vmatpush1.bf16.msra.mxu0 0
  %141 = vmatprep.subr.bf16.mxu0 0
  %142 = vmatpush1.bf16.msra.mxu0 0
  %143 = vmatprep.subr.bf16.mxu0 0
  %144 = vmatpush1.bf16.msra.mxu0 0
  %145 = vmatprep.mubr.bf16.mxu0 0
  %146 = vmatmul.mubr.bf16.gmra.mrb[0].mxu0 %v31
  %v147 = vpop.f32.mrb[0].mxu0
  %v148 = vadd.f32 0.0, %v147
  %v149 = vpop.f32.mrb[0].mxu0
  %v150 = vadd.f32 0.0, %v149
  %v151 = vpop.f32.mrb[0].mxu0
  %v152 = vadd.f32 0.0, %v151
  %v153 = vpop.f32.mrb[0].mxu0
  %v154 = vadd.f32 0.0, %v153
  %155 = vmatprep.mubr.bf16.mxu0 0
  %156 = vmatmul.mubr.bf16.gmra.mrb[0].mxu0 %v34
  %v157 = vpop.f32.mrb[0].mxu0
  %v158 = vadd.f32 0.0, %v157
  %v159 = vpop.f32.mrb[0].mxu0
  %v160 = vadd.f32 0.0, %v159
  %v161 = vpop.f32.mrb[0].mxu0
  %v162 = vadd.f32 0.0, %v161
  %v163 = vpop.f32.mrb[0].mxu0
  %v164 = vadd.f32 0.0, %v163
  %165 = vmatprep.mubr.bf16.mxu0 0
  %166 = vmatmul.mubr.bf16.gmra.mrb[0].mxu0 %v37
  %v167 = vpop.f32.mrb[0].mxu0
  %v168 = vadd.f32 0.0, %v167
  %v169 = vpop.f32.mrb[0].mxu0
  %v170 = vadd.f32 0.0, %v169
  %v171 = vpop.f32.mrb[0].mxu0
  %v172 = vpop.f32.mrb[0].mxu0
  %173 = vdwg.mxu0
  %v174 = vld [vmem:[%s1 + $0x50] sm:$0xff]
  %v175 = vld [vmem:[%s1 + $0x58] sm:$0xff]
  %v176 = vld [vmem:[%s1 + $0x60] sm:$0xff]
  %v177 = vld [vmem:[%s1 + $0x68] sm:$0xff]
  %v178 = vld [vmem:[%s1 + $0x70] sm:$0xff]
  %180 = vset.pattern.permute.xlu0 0
  %181 = vperm.xlu0 %180, %v174
  %v182 = vpop.permute.xlu0 %181
  %185 = vset.pattern.permute.xlu0 0
  %186 = vperm.xlu0 %185, %v175
  %v187 = vpop.permute.xlu0 %186
  %190 = vset.pattern.permute.xlu0 0
  %191 = vperm.xlu0 %190, %v176
  %v192 = vpop.permute.xlu0 %191
  %v194 = vadd.f32 %v87, %v182
  %v195 = vadd.f32 %v89, %v182
  %v196 = vadd.f32 %v148, %v182
  %v197 = vadd.f32 %v150, %v182
  %v198 = vadd.f32 %v91, %v187
  %v199 = vadd.f32 %v93, %v187
  %v200 = vadd.f32 %v152, %v187
  %v201 = vadd.f32 %v154, %v187
  %v202 = vadd.f32 %v97, %v192
  %v203 = vadd.f32 %v99, %v192
  %v204 = vadd.f32 %v158, %v192
  %v205 = vadd.f32 %v160, %v192
  %v206 = vmax.f32 %v194, 0.0
  %v207 = vmax.f32 %v195, 0.0
  %v208 = vmax.f32 %v196, 0.0
  %v209 = vmax.f32 %v197, 0.0
  %v210 = vmax.f32 %v198, 0.0
  %v211 = vmax.f32 %v199, 0.0
  %v212 = vmax.f32 %v200, 0.0
  %v213 = vmax.f32 %v201, 0.0
  %v214 = vmax.f32 %v202, 0.0
  %v215 = vmax.f32 %v203, 0.0
  %v216 = vmax.f32 %v204, 0.0
  %v217 = vmax.f32 %v205, 0.0
  %219 = vset.pattern.permute.xlu0 0
  %220 = vperm.xlu0 %219, %v177
  %v221 = vpop.permute.xlu0 %220
  %224 = vset.pattern.permute.xlu0 0
  %225 = vperm.xlu0 %224, %v178
  %v226 = vpop.permute.xlu0 %225
  %v228 = vadd.f32 %v101, %v221
  %v229 = vadd.f32 %v103, %v221
  %v230 = vadd.f32 %v162, %v221
  %v231 = vadd.f32 %v164, %v221
  %v232 = vadd.f32 %v107, %v226
  %v233 = vadd.f32 %v109, %v226
  %v234 = vadd.f32 %v168, %v226
  %v235 = vadd.f32 %v170, %v226
  %v236 = vlaneseq
  %v237 = vand.u32 %v236, 127
  %v238 = vadd.s32 %v237, 128
  %v239 = vadd.s32 %v237, 256
  %v240 = vadd.s32 %v237, 384
  %vm241 = vcmp.lt.s32.totalorder %v237, 0
  %v242 = vsub.s32 0, %v237
  %v243 = vsel %vm241, %v242, %v237
  %v244 = vshrl.u32 %v243, 8
  %v245 = vand.u32 %v243, 255
  %v246 = vsub.s32 0, %v245
  %v247 = vsel %vm241, %v246, %v245
  %vm248 = vcmp.lt.s32.totalorder %v238, 0
  %v249 = vsub.s32 0, %v238
  %v250 = vsel %vm248, %v249, %v238
  %v251 = vshrl.u32 %v250, 8
  %v252 = vand.u32 %v250, 255
  %v253 = vsub.s32 0, %v252
  %v254 = vsel %vm248, %v253, %v252
  %vm255 = vcmp.lt.s32.totalorder %v239, 0
  %v256 = vsub.s32 0, %v239
  %v257 = vsel %vm255, %v256, %v239
  %v258 = vshrl.u32 %v257, 8
  %v259 = vand.u32 %v257, 255
  %v260 = vsub.s32 0, %v259
  %v261 = vsel %vm255, %v260, %v259
  %vm262 = vcmp.lt.s32.totalorder %v240, 0
  %v263 = vsub.s32 0, %v240
  %v264 = vsel %vm262, %v263, %v240
  %v265 = vshrl.u32 %v264, 8
  %v266 = vand.u32 %v264, 255
  %v267 = vsub.s32 0, %v266
  %v268 = vsel %vm262, %v267, %v266
  %vm269 = vcmp.ne.s32.totalorder %v247, 0
  %vm270 = vcmp.ne.s32.totalorder %v254, 0
  %vm271 = vcmp.ne.s32.totalorder %v261, 0
  %vm272 = vcmp.ne.s32.totalorder %v268, 0
  %vm273 = vcmp.lt.s32.totalorder %v247, 0
  %vm274 = vcmp.lt.s32.totalorder %v254, 0
  %vm275 = vcmp.lt.s32.totalorder %v261, 0
  %vm276 = vcmp.lt.s32.totalorder %v268, 0
  %vm277 = vmand %vm273, %vm269
  %vm278 = vmand %vm274, %vm270
  %vm279 = vmand %vm275, %vm271
  %vm280 = vmand %vm276, %vm272
  %v281 = vadd.s32 %v247, 256
  %v282 = vadd.s32 %v254, 256
  %v283 = vadd.s32 %v261, 256
  %v284 = vadd.s32 %v268, 256
  %v285 = vsel %vm277, %v281, %v247
  %v286 = vsel %vm278, %v282, %v254
  %v287 = vsel %vm279, %v283, %v261
  %v288 = vsel %vm280, %v284, %v268
  %vm289 = vcmp.lt.s32.totalorder %v237, 0
  %v290 = vsub.s32 0, %v237
  %v291 = vsel %vm289, %v290, %v237
  %v292 = vshrl.u32 %v291, 4
  %v293 = vand.u32 %v291, 15
  %v294 = vsub.s32 0, %v293
  %v295 = vsel %vm289, %v294, %v293
  %vm296 = vcmp.lt.s32.totalorder %v238, 0
  %v297 = vsub.s32 0, %v238
  %v298 = vsel %vm296, %v297, %v238
  %v299 = vshrl.u32 %v298, 4
  %v300 = vand.u32 %v298, 15
  %v301 = vsub.s32 0, %v300
  %v302 = vsel %vm296, %v301, %v300
  %vm303 = vcmp.lt.s32.totalorder %v239, 0
  %v304 = vsub.s32 0, %v239
  %v305 = vsel %vm303, %v304, %v239
  %v306 = vshrl.u32 %v305, 4
  %v307 = vand.u32 %v305, 15
  %v308 = vsub.s32 0, %v307
  %v309 = vsel %vm303, %v308, %v307
  %vm310 = vcmp.lt.s32.totalorder %v240, 0
  %v311 = vsub.s32 0, %v240
  %v312 = vsel %vm310, %v311, %v240
  %v313 = vshrl.u32 %v312, 4
  %v314 = vand.u32 %v312, 15
  %v315 = vsub.s32 0, %v314
  %v316 = vsel %vm310, %v315, %v314
  %vm317 = vcmp.ne.s32.totalorder %v295, 0
  %vm318 = vcmp.ne.s32.totalorder %v302, 0
  %vm319 = vcmp.ne.s32.totalorder %v309, 0
  %vm320 = vcmp.ne.s32.totalorder %v316, 0
  %vm321 = vcmp.lt.s32.totalorder %v295, 0
  %vm322 = vcmp.lt.s32.totalorder %v302, 0
  %vm323 = vcmp.lt.s32.totalorder %v309, 0
  %vm324 = vcmp.lt.s32.totalorder %v316, 0
  %vm325 = vmand %vm321, %vm317
  %vm326 = vmand %vm322, %vm318
  %vm327 = vmand %vm323, %vm319
  %vm328 = vmand %vm324, %vm320
  %v329 = vadd.s32 %v295, 16
  %v330 = vadd.s32 %v302, 16
  %v331 = vadd.s32 %v309, 16
  %v332 = vadd.s32 %v316, 16
  %v333 = vsel %vm325, %v329, %v295
  %v334 = vsel %vm326, %v330, %v302
  %v335 = vsel %vm327, %v331, %v309
  %v336 = vsel %vm328, %v332, %v316
  %vm337 = vcmp.ge.s32.totalorder %v285, 16
  %vm338 = vcmp.ge.s32.totalorder %v286, 16
  %vm339 = vcmp.ge.s32.totalorder %v287, 16
  %vm340 = vcmp.ge.s32.totalorder %v288, 16
  %341 = vrot.lane.b32.xlu0 %v206, 16
  %v342 = vpop.permute.xlu0 %341
  %343 = vrot.lane.b32.xlu0 %v210, 16
  %v344 = vpop.permute.xlu0 %343
  %345 = vrot.lane.b32.xlu0 %v214, 16
  %v346 = vpop.permute.xlu0 %345
  %347 = vrot.lane.b32.xlu0 %v207, 16
  %v348 = vpop.permute.xlu0 %347
  %349 = vrot.lane.b32.xlu0 %v211, 16
  %v350 = vpop.permute.xlu0 %349
  %351 = vrot.lane.b32.xlu0 %v215, 16
  %v352 = vpop.permute.xlu0 %351
  %353 = vrot.lane.b32.xlu0 %v208, 16
  %v354 = vpop.permute.xlu0 %353
  %355 = vrot.lane.b32.xlu0 %v212, 16
  %v356 = vpop.permute.xlu0 %355
  %357 = vrot.lane.b32.xlu0 %v216, 16
  %v358 = vpop.permute.xlu0 %357
  %359 = vrot.lane.b32.xlu0 %v209, 16
  %v360 = vpop.permute.xlu0 %359
  %361 = vrot.lane.b32.xlu0 %v213, 16
  %v362 = vpop.permute.xlu0 %361
  %363 = vrot.lane.b32.xlu0 %v217, 16
  %v364 = vpop.permute.xlu0 %363
  %vm365 = vcmp.lt.s32.totalorder %v237, 16
  %v366 = vsel %vm365, %v354, %v360
  %v367 = vsel %vm365, %v356, %v362
  %v368 = vsel %vm365, %v358, %v364
  %v369 = vsel %vm365, %v348, %v354
  %v370 = vsel %vm365, %v350, %v356
  %v371 = vsel %vm365, %v352, %v358
  %v372 = vsel %vm365, %v342, %v348
  %v373 = vsel %vm365, %v344, %v350
  %v374 = vsel %vm365, %v346, %v352
  %v375 = vsel %vm365, %v360, %v342
  %v376 = vsel %vm365, %v362, %v344
  %v377 = vsel %vm365, %v364, %v346
  %v378 = vsel %vm337, 1, 0
  %v379 = vsel %vm338, 1, 0
  %v380 = vsel %vm339, 1, 0
  %v381 = vsel %vm340, 1, 0
  %vm382 = vcmp.eq.s32.totalorder %v378, 1
  %vm383 = vcmp.eq.s32.totalorder %v379, 1
  %vm384 = vcmp.eq.s32.totalorder %v380, 1
  %vm385 = vcmp.eq.s32.totalorder %v381, 1
  %v386 = vsel %vm382, %v375, 0.0
  %v387 = vsel %vm383, %v372, 0.0
  %v388 = vsel %vm384, %v369, 0.0
  %v389 = vsel %vm385, %v366, 0.0
  %v390 = vsel %vm382, %v376, 0.0
  %v391 = vsel %vm383, %v373, 0.0
  %v392 = vsel %vm384, %v370, 0.0
  %v393 = vsel %vm385, %v367, 0.0
  %v394 = vsel %vm382, %v377, 0.0
  %v395 = vsel %vm383, %v374, 0.0
  %v396 = vsel %vm384, %v371, 0.0
  %v397 = vsel %vm385, %v368, 0.0
  %vm398 = vcmp.lt.s32.totalorder %v285, 240
  %vm399 = vcmp.lt.s32.totalorder %v286, 240
  %vm400 = vcmp.lt.s32.totalorder %v287, 240
  %vm401 = vcmp.lt.s32.totalorder %v288, 240
  %402 = vrot.lane.b32.xlu0 %v206, 112
  %v403 = vpop.permute.xlu0 %402
  %404 = vrot.lane.b32.xlu0 %v210, 112
  %v405 = vpop.permute.xlu0 %404
  %406 = vrot.lane.b32.xlu0 %v214, 112
  %v407 = vpop.permute.xlu0 %406
  %408 = vrot.lane.b32.xlu0 %v207, 112
  %v409 = vpop.permute.xlu0 %408
  %410 = vrot.lane.b32.xlu0 %v211, 112
  %v411 = vpop.permute.xlu0 %410
  %412 = vrot.lane.b32.xlu0 %v215, 112
  %v413 = vpop.permute.xlu0 %412
  %414 = vrot.lane.b32.xlu0 %v208, 112
  %v415 = vpop.permute.xlu0 %414
  %416 = vrot.lane.b32.xlu0 %v212, 112
  %v417 = vpop.permute.xlu0 %416
  %418 = vrot.lane.b32.xlu0 %v216, 112
  %v419 = vpop.permute.xlu0 %418
  %420 = vrot.lane.b32.xlu0 %v209, 112
  %v421 = vpop.permute.xlu0 %420
  %422 = vrot.lane.b32.xlu0 %v213, 112
  %v423 = vpop.permute.xlu0 %422
  %424 = vrot.lane.b32.xlu0 %v217, 112
  %v425 = vpop.permute.xlu0 %424
  %vm426 = vcmp.lt.s32.totalorder %v237, 112
  %v427 = vsel %vm426, %v415, %v421
  %v428 = vsel %vm426, %v417, %v423
  %v429 = vsel %vm426, %v419, %v425
  %v430 = vsel %vm426, %v409, %v415
  %v431 = vsel %vm426, %v411, %v417
  %v432 = vsel %vm426, %v413, %v419
  %v433 = vsel %vm426, %v403, %v409
  %v434 = vsel %vm426, %v405, %v411
  %v435 = vsel %vm426, %v407, %v413
  %v436 = vsel %vm426, %v421, %v403
  %v437 = vsel %vm426, %v423, %v405
  %v438 = vsel %vm426, %v425, %v407
  %v439 = vsel %vm398, 1, 0
  %v440 = vsel %vm399, 1, 0
  %v441 = vsel %vm400, 1, 0
  %v442 = vsel %vm401, 1, 0
  %vm443 = vcmp.eq.s32.totalorder %v439, 1
  %vm444 = vcmp.eq.s32.totalorder %v440, 1
  %vm445 = vcmp.eq.s32.totalorder %v441, 1
  %vm446 = vcmp.eq.s32.totalorder %v442, 1
  %v447 = vsel %vm443, %v433, 0.0
  %v448 = vsel %vm444, %v430, 0.0
  %v449 = vsel %vm445, %v427, 0.0
  %v450 = vsel %vm446, %v436, 0.0
  %v451 = vsel %vm443, %v434, 0.0
  %v452 = vsel %vm444, %v431, 0.0
  %v453 = vsel %vm445, %v428, 0.0
  %v454 = vsel %vm446, %v437, 0.0
  %v455 = vsel %vm443, %v435, 0.0
  %v456 = vsel %vm444, %v432, 0.0
  %v457 = vsel %vm445, %v429, 0.0
  %v458 = vsel %vm446, %v438, 0.0
  %v459 = vld [vmem:[%s1 + $0x38] sm:$0xff]
  %v460 = vld [vmem:[%s1 + $0x40] sm:$0xff]
  %v461 = vld [vmem:[%s1 + $0x48] sm:$0xff]
  %463 = vset.pattern.permute.xlu0 0
  %464 = vperm.xlu0 %463, %v459
  %v465 = vpop.permute.xlu0 %464
  %468 = vset.pattern.permute.xlu0 0
  %469 = vperm.xlu0 %468, %v460
  %v470 = vpop.permute.xlu0 %469
  %473 = vset.pattern.permute.xlu0 0
  %474 = vperm.xlu0 %473, %v461
  %v475 = vpop.permute.xlu0 %474
  %v477 = vmul.f32 %v465, %v386
  %v478 = vmul.f32 %v465, %v387
  %v479 = vmul.f32 %v465, %v388
  %v480 = vmul.f32 %v465, %v389
  %v481 = vmul.f32 %v470, %v390
  %v482 = vmul.f32 %v470, %v391
  %v483 = vmul.f32 %v470, %v392
  %v484 = vmul.f32 %v470, %v393
  %v485 = vmul.f32 %v475, %v394
  %v486 = vmul.f32 %v475, %v395
  %v487 = vmul.f32 %v475, %v396
  %v488 = vmul.f32 %v475, %v397
  %489 = vset.pattern.permute.xlu0 3
  %490 = vperm.xlu0 %489, %v459
  %v491 = vpop.permute.xlu0 %490
  %493 = vset.pattern.permute.xlu0 3
  %494 = vperm.xlu0 %493, %v460
  %v495 = vpop.permute.xlu0 %494
  %497 = vset.pattern.permute.xlu0 3
  %498 = vperm.xlu0 %497, %v461
  %v499 = vpop.permute.xlu0 %498
  %v501 = vmul.f32 %v491, %v206
  %v502 = vmul.f32 %v491, %v207
  %v503 = vmul.f32 %v491, %v208
  %v504 = vmul.f32 %v491, %v209
  %v505 = vmul.f32 %v495, %v210
  %v506 = vmul.f32 %v495, %v211
  %v507 = vmul.f32 %v495, %v212
  %v508 = vmul.f32 %v495, %v213
  %v509 = vmul.f32 %v499, %v214
  %v510 = vmul.f32 %v499, %v215
  %v511 = vmul.f32 %v499, %v216
  %v512 = vmul.f32 %v499, %v217
  %v513 = vadd.f32 %v477, %v501
  %v514 = vadd.f32 %v478, %v502
  %v515 = vadd.f32 %v479, %v503
  %v516 = vadd.f32 %v480, %v504
  %v517 = vadd.f32 %v481, %v505
  %v518 = vadd.f32 %v482, %v506
  %v519 = vadd.f32 %v483, %v507
  %v520 = vadd.f32 %v484, %v508
  %v521 = vadd.f32 %v485, %v509
  %v522 = vadd.f32 %v486, %v510
  %v523 = vadd.f32 %v487, %v511
  %v524 = vadd.f32 %v488, %v512
  %525 = vset.pattern.permute.xlu0 6
  %526 = vperm.xlu0 %525, %v459
  %v527 = vpop.permute.xlu0 %526
  %529 = vset.pattern.permute.xlu0 6
  %530 = vperm.xlu0 %529, %v460
  %v531 = vpop.permute.xlu0 %530
  %533 = vset.pattern.permute.xlu0 6
  %534 = vperm.xlu0 %533, %v461
  %v535 = vpop.permute.xlu0 %534
  %v537 = vmul.f32 %v527, %v447
  %v538 = vmul.f32 %v527, %v448
  %v539 = vmul.f32 %v527, %v449
  %v540 = vmul.f32 %v527, %v450
  %v541 = vmul.f32 %v531, %v451
  %v542 = vmul.f32 %v531, %v452
  %v543 = vmul.f32 %v531, %v453
  %v544 = vmul.f32 %v531, %v454
  %v545 = vmul.f32 %v535, %v455
  %v546 = vmul.f32 %v535, %v456
  %v547 = vmul.f32 %v535, %v457
  %v548 = vmul.f32 %v535, %v458
  %v549 = vadd.f32 %v513, %v537
  %v550 = vadd.f32 %v514, %v538
  %v551 = vadd.f32 %v515, %v539
  %v552 = vadd.f32 %v516, %v540
  %v553 = vadd.f32 %v517, %v541
  %v554 = vadd.f32 %v518, %v542
  %v555 = vadd.f32 %v519, %v543
  %v556 = vadd.f32 %v520, %v544
  %v557 = vadd.f32 %v521, %v545
  %v558 = vadd.f32 %v522, %v546
  %v559 = vadd.f32 %v523, %v547
  %v560 = vadd.f32 %v524, %v548
  %561 = vset.pattern.permute.xlu0 1
  %562 = vperm.xlu0 %561, %v459
  %v563 = vpop.permute.xlu0 %562
  %565 = vset.pattern.permute.xlu0 1
  %566 = vperm.xlu0 %565, %v460
  %v567 = vpop.permute.xlu0 %566
  %569 = vset.pattern.permute.xlu0 1
  %570 = vperm.xlu0 %569, %v461
  %v571 = vpop.permute.xlu0 %570
  %v573 = vmul.f32 %v563, %v386
  %v574 = vmul.f32 %v563, %v387
  %v575 = vmul.f32 %v563, %v388
  %v576 = vmul.f32 %v563, %v389
  %v577 = vmul.f32 %v567, %v390
  %v578 = vmul.f32 %v567, %v391
  %v579 = vmul.f32 %v567, %v392
  %v580 = vmul.f32 %v567, %v393
  %v581 = vmul.f32 %v571, %v394
  %v582 = vmul.f32 %v571, %v395
  %v583 = vmul.f32 %v571, %v396
  %v584 = vmul.f32 %v571, %v397
  %585 = vset.pattern.permute.xlu0 4
  %586 = vperm.xlu0 %585, %v459
  %v587 = vpop.permute.xlu0 %586
  %589 = vset.pattern.permute.xlu0 4
  %590 = vperm.xlu0 %589, %v460
  %v591 = vpop.permute.xlu0 %590
  %593 = vset.pattern.permute.xlu0 4
  %594 = vperm.xlu0 %593, %v461
  %v595 = vpop.permute.xlu0 %594
  %v597 = vmul.f32 %v587, %v206
  %v598 = vmul.f32 %v587, %v207
  %v599 = vmul.f32 %v587, %v208
  %v600 = vmul.f32 %v587, %v209
  %v601 = vmul.f32 %v591, %v210
  %v602 = vmul.f32 %v591, %v211
  %v603 = vmul.f32 %v591, %v212
  %v604 = vmul.f32 %v591, %v213
  %v605 = vmul.f32 %v595, %v214
  %v606 = vmul.f32 %v595, %v215
  %v607 = vmul.f32 %v595, %v216
  %v608 = vmul.f32 %v595, %v217
  %v609 = vadd.f32 %v573, %v597
  %v610 = vadd.f32 %v574, %v598
  %v611 = vadd.f32 %v575, %v599
  %v612 = vadd.f32 %v576, %v600
  %v613 = vadd.f32 %v577, %v601
  %v614 = vadd.f32 %v578, %v602
  %v615 = vadd.f32 %v579, %v603
  %v616 = vadd.f32 %v580, %v604
  %v617 = vadd.f32 %v581, %v605
  %v618 = vadd.f32 %v582, %v606
  %v619 = vadd.f32 %v583, %v607
  %v620 = vadd.f32 %v584, %v608
  %621 = vset.pattern.permute.xlu0 7
  %622 = vperm.xlu0 %621, %v459
  %v623 = vpop.permute.xlu0 %622
  %625 = vset.pattern.permute.xlu0 7
  %626 = vperm.xlu0 %625, %v460
  %v627 = vpop.permute.xlu0 %626
  %629 = vset.pattern.permute.xlu0 7
  %630 = vperm.xlu0 %629, %v461
  %v631 = vpop.permute.xlu0 %630
  %v633 = vmul.f32 %v623, %v447
  %v634 = vmul.f32 %v623, %v448
  %v635 = vmul.f32 %v623, %v449
  %v636 = vmul.f32 %v623, %v450
  %v637 = vmul.f32 %v627, %v451
  %v638 = vmul.f32 %v627, %v452
  %v639 = vmul.f32 %v627, %v453
  %v640 = vmul.f32 %v627, %v454
  %v641 = vmul.f32 %v631, %v455
  %v642 = vmul.f32 %v631, %v456
  %v643 = vmul.f32 %v631, %v457
  %v644 = vmul.f32 %v631, %v458
  %v645 = vadd.f32 %v609, %v633
  %v646 = vadd.f32 %v610, %v634
  %v647 = vadd.f32 %v611, %v635
  %v648 = vadd.f32 %v612, %v636
  %v649 = vadd.f32 %v613, %v637
  %v650 = vadd.f32 %v614, %v638
  %v651 = vadd.f32 %v615, %v639
  %v652 = vadd.f32 %v616, %v640
  %v653 = vadd.f32 %v617, %v641
  %v654 = vadd.f32 %v618, %v642
  %v655 = vadd.f32 %v619, %v643
  %v656 = vadd.f32 %v620, %v644
  %657 = vset.pattern.permute.xlu0 2
  %658 = vperm.xlu0 %657, %v459
  %v659 = vpop.permute.xlu0 %658
  %661 = vset.pattern.permute.xlu0 2
  %662 = vperm.xlu0 %661, %v460
  %v663 = vpop.permute.xlu0 %662
  %665 = vset.pattern.permute.xlu0 2
  %666 = vperm.xlu0 %665, %v461
  %v667 = vpop.permute.xlu0 %666
  %v669 = vmul.f32 %v659, %v386
  %v670 = vmul.f32 %v659, %v387
  %v671 = vmul.f32 %v659, %v388
  %v672 = vmul.f32 %v659, %v389
  %v673 = vmul.f32 %v663, %v390
  %v674 = vmul.f32 %v663, %v391
  %v675 = vmul.f32 %v663, %v392
  %v676 = vmul.f32 %v663, %v393
  %v677 = vmul.f32 %v667, %v394
  %v678 = vmul.f32 %v667, %v395
  %v679 = vmul.f32 %v667, %v396
  %v680 = vmul.f32 %v667, %v397
  %681 = vset.pattern.permute.xlu0 5
  %682 = vperm.xlu0 %681, %v459
  %v683 = vpop.permute.xlu0 %682
  %685 = vset.pattern.permute.xlu0 5
  %686 = vperm.xlu0 %685, %v460
  %v687 = vpop.permute.xlu0 %686
  %689 = vset.pattern.permute.xlu0 5
  %690 = vperm.xlu0 %689, %v461
  %v691 = vpop.permute.xlu0 %690
  %v693 = vmul.f32 %v683, %v206
  %v694 = vmul.f32 %v683, %v207
  %v695 = vmul.f32 %v683, %v208
  %v696 = vmul.f32 %v683, %v209
  %v697 = vmul.f32 %v687, %v210
  %v698 = vmul.f32 %v687, %v211
  %v699 = vmul.f32 %v687, %v212
  %v700 = vmul.f32 %v687, %v213
  %v701 = vmul.f32 %v691, %v214
  %v702 = vmul.f32 %v691, %v215
  %v703 = vmul.f32 %v691, %v216
  %v704 = vmul.f32 %v691, %v217
  %v705 = vadd.f32 %v669, %v693
  %v706 = vadd.f32 %v670, %v694
  %v707 = vadd.f32 %v671, %v695
  %v708 = vadd.f32 %v672, %v696
  %v709 = vadd.f32 %v673, %v697
  %v710 = vadd.f32 %v674, %v698
  %v711 = vadd.f32 %v675, %v699
  %v712 = vadd.f32 %v676, %v700
  %v713 = vadd.f32 %v677, %v701
  %v714 = vadd.f32 %v678, %v702
  %v715 = vadd.f32 %v679, %v703
  %v716 = vadd.f32 %v680, %v704
  %717 = vset.pattern.permute.xlu0 8
  %718 = vperm.xlu0 %717, %v459
  %v719 = vpop.permute.xlu0 %718
  %721 = vset.pattern.permute.xlu0 8
  %722 = vperm.xlu0 %721, %v460
  %v723 = vpop.permute.xlu0 %722
  %725 = vset.pattern.permute.xlu0 8
  %726 = vperm.xlu0 %725, %v461
  %v727 = vpop.permute.xlu0 %726
  %v729 = vmul.f32 %v719, %v447
  %v730 = vmul.f32 %v719, %v448
  %v731 = vmul.f32 %v719, %v449
  %v732 = vmul.f32 %v719, %v450
  %v733 = vmul.f32 %v723, %v451
  %v734 = vmul.f32 %v723, %v452
  %v735 = vmul.f32 %v723, %v453
  %v736 = vmul.f32 %v723, %v454
  %v737 = vmul.f32 %v727, %v455
  %v738 = vmul.f32 %v727, %v456
  %v739 = vmul.f32 %v727, %v457
  %v740 = vmul.f32 %v727, %v458
  %v741 = vadd.f32 %v705, %v729
  %v742 = vadd.f32 %v706, %v730
  %v743 = vadd.f32 %v707, %v731
  %v744 = vadd.f32 %v708, %v732
  %v745 = vadd.f32 %v709, %v733
  %v746 = vadd.f32 %v710, %v734
  %v747 = vadd.f32 %v711, %v735
  %v748 = vadd.f32 %v712, %v736
  %v749 = vadd.f32 %v713, %v737
  %v750 = vadd.f32 %v714, %v738
  %v751 = vadd.f32 %v715, %v739
  %v752 = vadd.f32 %v716, %v740
  %vm753 = vcmp.ge.s32.totalorder %v333, 1
  %vm754 = vcmp.ge.s32.totalorder %v334, 1
  %vm755 = vcmp.ge.s32.totalorder %v335, 1
  %vm756 = vcmp.ge.s32.totalorder %v336, 1
  %757 = vrot.lane.b32.xlu0 %v549, 1
  %v758 = vpop.permute.xlu0 %757
  %759 = vrot.lane.b32.xlu0 %v553, 1
  %v760 = vpop.permute.xlu0 %759
  %761 = vrot.lane.b32.xlu0 %v557, 1
  %v762 = vpop.permute.xlu0 %761
  %763 = vrot.lane.b32.xlu0 %v550, 1
  %v764 = vpop.permute.xlu0 %763
  %765 = vrot.lane.b32.xlu0 %v554, 1
  %v766 = vpop.permute.xlu0 %765
  %767 = vrot.lane.b32.xlu0 %v558, 1
  %v768 = vpop.permute.xlu0 %767
  %769 = vrot.lane.b32.xlu0 %v551, 1
  %v770 = vpop.permute.xlu0 %769
  %771 = vrot.lane.b32.xlu0 %v555, 1
  %v772 = vpop.permute.xlu0 %771
  %773 = vrot.lane.b32.xlu0 %v559, 1
  %v774 = vpop.permute.xlu0 %773
  %775 = vrot.lane.b32.xlu0 %v552, 1
  %v776 = vpop.permute.xlu0 %775
  %777 = vrot.lane.b32.xlu0 %v556, 1
  %v778 = vpop.permute.xlu0 %777
  %779 = vrot.lane.b32.xlu0 %v560, 1
  %v780 = vpop.permute.xlu0 %779
  %vm781 = vcmp.lt.s32.totalorder %v237, 1
  %v782 = vsel %vm781, %v770, %v776
  %v783 = vsel %vm781, %v772, %v778
  %v784 = vsel %vm781, %v774, %v780
  %v785 = vsel %vm781, %v764, %v770
  %v786 = vsel %vm781, %v766, %v772
  %v787 = vsel %vm781, %v768, %v774
  %v788 = vsel %vm781, %v758, %v764
  %v789 = vsel %vm781, %v760, %v766
  %v790 = vsel %vm781, %v762, %v768
  %v791 = vsel %vm781, %v776, %v758
  %v792 = vsel %vm781, %v778, %v760
  %v793 = vsel %vm781, %v780, %v762
  %v794 = vsel %vm753, 1, 0
  %v795 = vsel %vm754, 1, 0
  %v796 = vsel %vm755, 1, 0
  %v797 = vsel %vm756, 1, 0
  %vm798 = vcmp.eq.s32.totalorder %v794, 1
  %vm799 = vcmp.eq.s32.totalorder %v795, 1
  %vm800 = vcmp.eq.s32.totalorder %v796, 1
  %vm801 = vcmp.eq.s32.totalorder %v797, 1
  %v802 = vsel %vm798, %v791, 0.0
  %v803 = vsel %vm799, %v788, 0.0
  %v804 = vsel %vm800, %v785, 0.0
  %v805 = vsel %vm801, %v782, 0.0
  %v806 = vsel %vm798, %v792, 0.0
  %v807 = vsel %vm799, %v789, 0.0
  %v808 = vsel %vm800, %v786, 0.0
  %v809 = vsel %vm801, %v783, 0.0
  %v810 = vsel %vm798, %v793, 0.0
  %v811 = vsel %vm799, %v790, 0.0
  %v812 = vsel %vm800, %v787, 0.0
  %v813 = vsel %vm801, %v784, 0.0
  %v814 = vadd.f32 %v645, %v802
  %v815 = vadd.f32 %v646, %v803
  %v816 = vadd.f32 %v647, %v804
  %v817 = vadd.f32 %v648, %v805
  %v818 = vadd.f32 %v649, %v806
  %v819 = vadd.f32 %v650, %v807
  %v820 = vadd.f32 %v651, %v808
  %v821 = vadd.f32 %v652, %v809
  %v822 = vadd.f32 %v653, %v810
  %v823 = vadd.f32 %v654, %v811
  %v824 = vadd.f32 %v655, %v812
  %v825 = vadd.f32 %v656, %v813
  %vm826 = vcmp.lt.s32.totalorder %v333, 15
  %vm827 = vcmp.lt.s32.totalorder %v334, 15
  %vm828 = vcmp.lt.s32.totalorder %v335, 15
  %vm829 = vcmp.lt.s32.totalorder %v336, 15
  %830 = vrot.lane.b32.xlu0 %v741, 127
  %v831 = vpop.permute.xlu0 %830
  %832 = vrot.lane.b32.xlu0 %v745, 127
  %v833 = vpop.permute.xlu0 %832
  %834 = vrot.lane.b32.xlu0 %v749, 127
  %v835 = vpop.permute.xlu0 %834
  %836 = vrot.lane.b32.xlu0 %v742, 127
  %v837 = vpop.permute.xlu0 %836
  %838 = vrot.lane.b32.xlu0 %v746, 127
  %v839 = vpop.permute.xlu0 %838
  %840 = vrot.lane.b32.xlu0 %v750, 127
  %v841 = vpop.permute.xlu0 %840
  %842 = vrot.lane.b32.xlu0 %v743, 127
  %v843 = vpop.permute.xlu0 %842
  %844 = vrot.lane.b32.xlu0 %v747, 127
  %v845 = vpop.permute.xlu0 %844
  %846 = vrot.lane.b32.xlu0 %v751, 127
  %v847 = vpop.permute.xlu0 %846
  %848 = vrot.lane.b32.xlu0 %v744, 127
  %v849 = vpop.permute.xlu0 %848
  %850 = vrot.lane.b32.xlu0 %v748, 127
  %v851 = vpop.permute.xlu0 %850
  %852 = vrot.lane.b32.xlu0 %v752, 127
  %v853 = vpop.permute.xlu0 %852
  %vm854 = vcmp.lt.s32.totalorder %v237, 127
  %v855 = vsel %vm854, %v843, %v849
  %v856 = vsel %vm854, %v845, %v851
  %v857 = vsel %vm854, %v847, %v853
  %v858 = vsel %vm854, %v837, %v843
  %v859 = vsel %vm854, %v839, %v845
  %v860 = vsel %vm854, %v841, %v847
  %v861 = vsel %vm854, %v831, %v837
  %v862 = vsel %vm854, %v833, %v839
  %v863 = vsel %vm854, %v835, %v841
  %v864 = vsel %vm854, %v849, %v831
  %v865 = vsel %vm854, %v851, %v833
  %v866 = vsel %vm854, %v853, %v835
  %v867 = vsel %vm826, 1, 0
  %v868 = vsel %vm827, 1, 0
  %v869 = vsel %vm828, 1, 0
  %v870 = vsel %vm829, 1, 0
  %vm871 = vcmp.eq.s32.totalorder %v867, 1
  %vm872 = vcmp.eq.s32.totalorder %v868, 1
  %vm873 = vcmp.eq.s32.totalorder %v869, 1
  %vm874 = vcmp.eq.s32.totalorder %v870, 1
  %v875 = vsel %vm871, %v861, 0.0
  %v876 = vsel %vm872, %v858, 0.0
  %v877 = vsel %vm873, %v855, 0.0
  %v878 = vsel %vm874, %v864, 0.0
  %v879 = vsel %vm871, %v862, 0.0
  %v880 = vsel %vm872, %v859, 0.0
  %v881 = vsel %vm873, %v856, 0.0
  %v882 = vsel %vm874, %v865, 0.0
  %v883 = vsel %vm871, %v863, 0.0
  %v884 = vsel %vm872, %v860, 0.0
  %v885 = vsel %vm873, %v857, 0.0
  %v886 = vsel %vm874, %v866, 0.0
  %v887 = vadd.f32 %v814, %v875
  %v888 = vadd.f32 %v815, %v876
  %v889 = vadd.f32 %v816, %v877
  %v890 = vadd.f32 %v817, %v878
  %v891 = vadd.f32 %v818, %v879
  %v892 = vadd.f32 %v819, %v880
  %v893 = vadd.f32 %v820, %v881
  %v894 = vadd.f32 %v821, %v882
  %v895 = vadd.f32 %v822, %v883
  %v896 = vadd.f32 %v823, %v884
  %v897 = vadd.f32 %v824, %v885
  %v898 = vadd.f32 %v825, %v886
  %v899 = vld [vmem:[%s1 + $0x78] sm:$0xff]
  %v900 = vld [vmem:[%s1 + $0x80] sm:$0xff]
  %v901 = vld [vmem:[%s1 + $0x88] sm:$0xff]
  %903 = vset.pattern.permute.xlu0 0
  %904 = vperm.xlu0 %903, %v899
  %v905 = vpop.permute.xlu0 %904
  %908 = vset.pattern.permute.xlu0 0
  %909 = vperm.xlu0 %908, %v900
  %v910 = vpop.permute.xlu0 %909
  %913 = vset.pattern.permute.xlu0 0
  %914 = vperm.xlu0 %913, %v901
  %v915 = vpop.permute.xlu0 %914
  %v917 = vadd.f32 %v887, %v905
  %v918 = vadd.f32 %v888, %v905
  %v919 = vadd.f32 %v889, %v905
  %v920 = vadd.f32 %v890, %v905
  %v921 = vadd.f32 %v891, %v910
  %v922 = vadd.f32 %v892, %v910
  %v923 = vadd.f32 %v893, %v910
  %v924 = vadd.f32 %v894, %v910
  %v925 = vadd.f32 %v895, %v915
  %v926 = vadd.f32 %v896, %v915
  %v927 = vadd.f32 %v897, %v915
  %v928 = vadd.f32 %v898, %v915
  %v929 = vmax.f32 %v917, 0.0
  %v930 = vmax.f32 %v918, 0.0
  %v931 = vmax.f32 %v919, 0.0
  %v932 = vmax.f32 %v920, 0.0
  %v933 = vmax.f32 %v921, 0.0
  %v934 = vmax.f32 %v922, 0.0
  %v935 = vmax.f32 %v923, 0.0
  %v936 = vmax.f32 %v924, 0.0
  %v937 = vmax.f32 %v925, 0.0
  %v938 = vmax.f32 %v926, 0.0
  %v939 = vmax.f32 %v927, 0.0
  %v940 = vmax.f32 %v928, 0.0
  %v941 = vld [vmem:[%s1 + $0x28] sm:$0xff]
  %v942 = vld [vmem:[%s1 + $0x30] sm:$0xff]
  %v943 = vpack.c.bf16 %v942, %v941
  %v944 = vpack.c.bf16 %v933, %v929
  %v945 = vpack.c.bf16 %v934, %v930
  %v946 = vpack.c.bf16 %v935, %v931
  %v947 = vpack.c.bf16 %v936, %v932
  %v948 = vpack.c.bf16 %v937, %v937
  %v949 = vpack.c.bf16 %v938, %v938
  %v950 = vpack.c.bf16 %v939, %v939
  %v951 = vpack.c.bf16 %v940, %v940
  %v952 = vld [vmem:[%s1 + $0x90] sm:$0xff]
  %v953 = vld [vmem:[%s1 + $0x98] sm:$0xff]
  %955 = vset.pattern.permute.xlu0 0
  %956 = vperm.xlu0 %955, %v952
  %v957 = vpop.permute.xlu0 %956
  %960 = vset.pattern.permute.xlu0 0
  %961 = vperm.xlu0 %960, %v953
  %v962 = vpop.permute.xlu0 %961
  %vm964 = vcmask 195584
  %v966 = vsel %vm964, %v943, 0
  %v969 = vsel %vm39, %v948, 0
  %v972 = vsel %vm39, %v949, 0
  %v975 = vsel %vm39, %v950, 0
  %v978 = vsel %vm39, %v951, 0
  %980 = vmatprep.subr.bf16.mxu0 %v945
  %981 = vmatpush1.bf16.msra.mxu0 %v944
  %982 = vmatprep.subr.bf16.mxu0 %v972
  %983 = vmatpush1.bf16.msra.mxu0 %v969
  %984 = vmatprep.subr.bf16.mxu0 0
  %985 = vmatpush1.bf16.msra.mxu0 0
  %986 = vmatprep.subr.bf16.mxu0 0
  %987 = vmatpush1.bf16.msra.mxu0 0
  %988 = vmatprep.subr.bf16.mxu0 0
  %989 = vmatpush1.bf16.msra.mxu0 0
  %990 = vmatprep.subr.bf16.mxu0 0
  %991 = vmatpush1.bf16.msra.mxu0 0
  %992 = vmatprep.subr.bf16.mxu0 0
  %993 = vmatpush1.bf16.msra.mxu0 0
  %994 = vmatprep.subr.bf16.mxu0 0
  %995 = vmatpush1.bf16.msra.mxu0 0
  %996 = vmatprep.subr.bf16.mxu0 0
  %997 = vmatpush1.bf16.msra.mxu0 0
  %998 = vmatprep.subr.bf16.mxu0 0
  %999 = vmatpush1.bf16.msra.mxu0 0
  %1000 = vmatprep.subr.bf16.mxu0 0
  %1001 = vmatpush1.bf16.msra.mxu0 0
  %1002 = vmatprep.subr.bf16.mxu0 0
  %1003 = vmatpush1.bf16.msra.mxu0 0
  %1004 = vmatprep.subr.bf16.mxu0 0
  %1005 = vmatpush1.bf16.msra.mxu0 0
  %1006 = vmatprep.subr.bf16.mxu0 0
  %1007 = vmatpush1.bf16.msra.mxu0 0
  %1008 = vmatprep.subr.bf16.mxu0 0
  %1009 = vmatpush1.bf16.msra.mxu0 0
  %1010 = vmatprep.subr.bf16.mxu0 0
  %1011 = vmatpush1.bf16.msra.mxu0 0
  %1012 = vmatprep.mubr.bf16.mxu0 0
  %1013 = vmatmul.mubr.bf16.gmra.mrb[0].mxu0 %v966
  %v1014 = vpop.f32.mrb[0].mxu0
  %v1015 = vadd.f32 %v957, %v1014
  %v1016 = vpop.f32.mrb[0].mxu0
  %v1017 = vadd.f32 %v957, %v1016
  %v1018 = vpop.f32.mrb[0].mxu0
  %v1019 = vadd.f32 %v962, %v1018
  %v1020 = vpop.f32.mrb[0].mxu0
  %v1021 = vadd.f32 %v962, %v1020
  %1022 = vdwg.mxu0
  %1023 = vmatprep.subr.bf16.mxu0 %v947
  %1024 = vmatpush1.bf16.msra.mxu0 %v946
  %1025 = vmatprep.subr.bf16.mxu0 %v978
  %1026 = vmatpush1.bf16.msra.mxu0 %v975
  %1027 = vmatprep.subr.bf16.mxu0 0
  %1028 = vmatpush1.bf16.msra.mxu0 0
  %1029 = vmatprep.subr.bf16.mxu0 0
  %1030 = vmatpush1.bf16.msra.mxu0 0
  %1031 = vmatprep.subr.bf16.mxu0 0
  %1032 = vmatpush1.bf16.msra.mxu0 0
  %1033 = vmatprep.subr.bf16.mxu0 0
  %1034 = vmatpush1.bf16.msra.mxu0 0
  %1035 = vmatprep.subr.bf16.mxu0 0
  %1036 = vmatpush1.bf16.msra.mxu0 0
  %1037 = vmatprep.subr.bf16.mxu0 0
  %1038 = vmatpush1.bf16.msra.mxu0 0
  %1039 = vmatprep.subr.bf16.mxu0 0
  %1040 = vmatpush1.bf16.msra.mxu0 0
  %1041 = vmatprep.subr.bf16.mxu0 0
  %1042 = vmatpush1.bf16.msra.mxu0 0
  %1043 = vmatprep.subr.bf16.mxu0 0
  %1044 = vmatpush1.bf16.msra.mxu0 0
  %1045 = vmatprep.subr.bf16.mxu0 0
  %1046 = vmatpush1.bf16.msra.mxu0 0
  %1047 = vmatprep.subr.bf16.mxu0 0
  %1048 = vmatpush1.bf16.msra.mxu0 0
  %1049 = vmatprep.subr.bf16.mxu0 0
  %1050 = vmatpush1.bf16.msra.mxu0 0
  %1051 = vmatprep.subr.bf16.mxu0 0
  %1052 = vmatpush1.bf16.msra.mxu0 0
  %1053 = vmatprep.subr.bf16.mxu0 0
  %1054 = vmatpush1.bf16.msra.mxu0 0
  %1055 = vmatprep.mubr.bf16.mxu0 0
  %1056 = vmatmul.mubr.bf16.gmra.mrb[0].mxu0 %v966
  %v1057 = vpop.f32.mrb[0].mxu0
  %v1058 = vadd.f32 %v957, %v1057
  %v1059 = vpop.f32.mrb[0].mxu0
  %v1060 = vadd.f32 %v957, %v1059
  %v1061 = vpop.f32.mrb[0].mxu0
  %v1062 = vadd.f32 %v962, %v1061
  %v1063 = vpop.f32.mrb[0].mxu0
  %v1064 = vadd.f32 %v962, %v1063
  %1065 = vdwg.mxu0
  %v1066 = vadd.f32 %v1015, %v228
  %v1067 = vadd.f32 %v1017, %v229
  %v1068 = vadd.f32 %v1058, %v230
  %v1069 = vadd.f32 %v1060, %v231
  %v1070 = vadd.f32 %v1019, %v232
  %v1071 = vadd.f32 %v1021, %v233
  %v1072 = vadd.f32 %v1062, %v234
  %v1073 = vadd.f32 %v1064, %v235
  %1074 = vst [vmem:[%s2] sm:$0xff] %v1066
  %1075 = vst [vmem:[%s2 + $0x8] sm:$0xff] %v1067
  %1076 = vst [vmem:[%s2 + $0x10] sm:$0xff] %v1070
  %1077 = vst [vmem:[%s2 + $0x18] sm:$0xff] %v1071
  %s1078 = scalar_lea.vmem %s2, 32
  %1079 = vst [vmem:[%s1078] sm:$0xff] %v1068
  %1080 = vst [vmem:[%s1078 + $0x8] sm:$0xff] %v1069
  %1081 = vst [vmem:[%s1078 + $0x10] sm:$0xff] %v1072
  %1082 = vst [vmem:[%s1078 + $0x18] sm:$0xff] %v1073
  // Predicated region
  $region10: #{mbv3_block.1} parent=0 // pred_check
    _
  $region11: #{mbv3_block.1} parent=0 // pred_check_branch
    %1084 = sbr.rel (0) target = $region13
  $region12: #{mbv3_block.1} parent=0 // pred_region
    _
  $region13: #{mbv3_block.1} parent=0 // pred_fallthru
    _
  // Predicated region
  $region14: #{mbv3_block.1} parent=0 // pred_check
    _
  $region15: #{mbv3_block.1} parent=0 // pred_check_branch
    %1086 = sbr.rel (0) target = $region17
  $region16: #{mbv3_block.1} parent=0 // pred_region
    _
  $region17: #{mbv3_block.1} parent=0 // pred_fallthru
    _

</llo_original>
